<compile_context>
chip_gen: v5e
topology: v5e:2x2
jax: 0.10.0
libtpu: 0.0.40
codegen_flags: <defaults>
</compile_context>

<pallas_src>
import functools
import math

import jax
import jax.numpy as jnp
from jax.experimental import pallas as pl
from jax.experimental.pallas import tpu as pltpu


# ------------------------------------------------------------------ helpers --
def _round_up(x, m):
    return ((x + m - 1) // m) * m


# ------------------------------------------------------------------- kernel --
def _jtransup_score_kernel(u_ref, ie_ref, wrt_ref, wr_ref, wn_ref, o_ref, *,
                           l1_flag, mxu_dtype):
    """jTransUP rec score for one (TILE_B, D) batch tile.

    Weight slabs carry the two "/2" scalings already folded in:
      pre  = (u + ie) @ W_r^T              (getPreferences logits)
      r_e  = pre @ W_r ;  norm = pre @ W_n
      score = sum(|proj(u) + r_e - proj(ie)|, -1)   (or squared)
    with the two TransH projections fused as
      diff = (u - ie) - ((u - ie) . norm) * norm + r_e.
    """
    u = u_ref[...].astype(jnp.float32)        # (TB, D) f32 (from bf16 HBM)
    ie = ie_ref[...].astype(jnp.float32)      # (TB, D) f32

    # preference logits: standard (1,0) contraction against pre-transposed W_r
    x = (u + ie).astype(mxu_dtype)
    pre = jnp.dot(x, wrt_ref[...], preferred_element_type=jnp.float32)   # (TB, Rp)

    p = pre.astype(mxu_dtype)
    r_e = jnp.dot(p, wr_ref[...], preferred_element_type=jnp.float32)    # (TB, D)
    norm = jnp.dot(p, wn_ref[...], preferred_element_type=jnp.float32)   # (TB, D)

    # fused TransH hyperplane projections (f32 on the VPU)
    du = u - ie
    diff = du - jnp.sum(du * norm, axis=-1, keepdims=True) * norm + r_e

    if l1_flag:
        s = jnp.sum(jnp.abs(diff), axis=-1)   # (TB,)
    else:
        s = jnp.sum(diff * diff, axis=-1)

    # lane-dense store: scores laid out along the lane axis
    o_ref[...] = s.reshape(o_ref.shape)


def jtransup_score_pallas(u_e, ie_e, w_rT, w_r, w_n, *, l1_flag, tile_b=1024):
    """Batch-tiled Pallas launch.

    u_e/ie_e: (B, D) f32 activations (cast to bf16 here, once).
    w_rT: (D, Rp), w_r/w_n: (Rp, D) -- already 0.5-folded, R-padded, mxu dtype.
    """
    B, D = u_e.shape
    r_pad = w_r.shape[0]
    mxu_dtype = w_r.dtype

    # tile size: big enough to amortize the ~0.35us per-grid-step overhead,
    # but keep >= 2 tiles when B allows so v7x can split across its 2 TCs.
    tile_b = max(128, _round_up(tile_b, 128))
    b_ceil = _round_up(B, 128)
    if b_ceil >= 256:
        tile_b = min(tile_b, _round_up(b_ceil // 2, 128))
    tile_b = min(tile_b, b_ceil)

    b_pad = _round_up(B, tile_b)
    n_tiles = b_pad // tile_b

    # bf16 activations (halves HBM read traffic); batch zero-pad is inert.
    u_p = jnp.pad(u_e.astype(mxu_dtype), ((0, b_pad - B), (0, 0)))
    ie_p = jnp.pad(ie_e.astype(mxu_dtype), ((0, b_pad - B), (0, 0)))

    # scoped-VMEM budget from the real footprint (double-buffered activations,
    # double-buffered tiny weights, f32 temporaries); capped at 32 MiB so it
    # stays safe on v7x (64 MiB physical).
    itemsize = jnp.dtype(mxu_dtype).itemsize
    d_lanes = _round_up(D, 128)
    r_lanes = _round_up(r_pad, 128)
    w_bytes = 2 * (w_rT.size + w_r.size + w_n.size) * itemsize
    act_bytes = 2 * 2 * tile_b * d_lanes * itemsize
    out_bytes = 2 * tile_b * 4
    tmp_bytes = tile_b * (8 * d_lanes + 2 * r_lanes) * 4
    vmem_limit = int(min(max(w_bytes + act_bytes + out_bytes + tmp_bytes,
                             16 << 20), 32 << 20))

    out = pl.pallas_call(
        functools.partial(_jtransup_score_kernel, l1_flag=l1_flag,
                          mxu_dtype=mxu_dtype),
        out_shape=jax.ShapeDtypeStruct((n_tiles, 1, tile_b), jnp.float32),
        grid=(n_tiles,),
        in_specs=[
            pl.BlockSpec((tile_b, D), lambda b: (b, 0)),     # u tile
            pl.BlockSpec((tile_b, D), lambda b: (b, 0)),     # ie tile
            pl.BlockSpec((D, r_pad), lambda b: (0, 0)),      # W_r^T (resident)
            pl.BlockSpec((r_pad, D), lambda b: (0, 0)),      # W_r   (resident)
            pl.BlockSpec((r_pad, D), lambda b: (0, 0)),      # W_n   (resident)
        ],
        out_specs=pl.BlockSpec((1, 1, tile_b), lambda b: (b, 0, 0)),
        compiler_params=pltpu.CompilerParams(
            dimension_semantics=("parallel",),
            vmem_limit_bytes=vmem_limit),
    )(u_p, ie_p, w_rT, w_r, w_n)

    return out.reshape(b_pad)[:B]


# ---------------------------------------------------------- parameter setup --
def _xavier_uniform(key, shape):
    fan_in, fan_out = shape[1], shape[0]
    bound = math.sqrt(6.0 / (fan_in + fan_out))
    return jax.random.uniform(key, shape, jnp.float32, minval=-bound, maxval=bound)


def _l2_normalize_rows(w, eps=1e-12):
    n = jnp.sqrt(jnp.sum(w * w, axis=1, keepdims=True))
    return w / jnp.maximum(n, eps)


def init_jtransup_params(key, user_total, item_total, entity_total,
                         relation_total, embedding_size):
    ks = jax.random.split(key, 7)
    user_w = _l2_normalize_rows(_xavier_uniform(ks[0], (user_total, embedding_size)))
    item_w = _l2_normalize_rows(_xavier_uniform(ks[1], (item_total, embedding_size)))
    pref_w = _l2_normalize_rows(_xavier_uniform(ks[2], (relation_total, embedding_size)))
    pref_norm_w = _l2_normalize_rows(_xavier_uniform(ks[3], (relation_total, embedding_size)))
    ent_w = _l2_normalize_rows(_xavier_uniform(ks[4], (entity_total, embedding_size)))
    # padding row of zeros at index ent_total - 1 (= entity_total)
    ent_w = jnp.concatenate([ent_w, jnp.zeros((1, embedding_size), jnp.float32)], axis=0)
    rel_w = _l2_normalize_rows(_xavier_uniform(ks[5], (relation_total, embedding_size)))
    norm_w = _l2_normalize_rows(_xavier_uniform(ks[6], (relation_total, embedding_size)))
    return dict(user=user_w, item=item_w, pref=pref_w, pref_norm=pref_norm_w,
                ent=ent_w, rel=rel_w, norm=norm_w)


def build_item2ent_table(i_map, new_map, item_total, pad_index):
    """One-time replacement for the per-call paddingItems host loop."""
    tbl = []
    for item_id in range(item_total):
        ent_id = new_map[i_map[item_id]][0]
        tbl.append(ent_id if ent_id != -1 else pad_index)
    return jnp.asarray(tbl, dtype=jnp.int32)


def prepare_jtransup(params, i_map, new_map, item_total, ent_total, *,
                     mxu_dtype=jnp.bfloat16, r_align=128):
    """One-time prep: fold the two '/2' scalings into the relation weights,
    zero-pad R to a lane multiple (inert), pre-transpose W_r, cast to the MXU
    dtype, and build the item->entity id table."""
    R, _ = params["pref"].shape
    r_pad = _round_up(R, r_align)
    w_r = 0.5 * (params["pref"] + params["rel"])
    w_n = 0.5 * (params["pref_norm"] + params["norm"])
    w_r = jnp.pad(w_r, ((0, r_pad - R), (0, 0)))   # zero rows -> zero logits
    w_n = jnp.pad(w_n, ((0, r_pad - R), (0, 0)))
    return dict(
        user=params["user"], item=params["item"], ent=params["ent"],
        w_rT=w_r.T.astype(mxu_dtype),              # (D, Rp) pre-transposed
        w_r=w_r.astype(mxu_dtype),                 # (Rp, D)
        w_n=w_n.astype(mxu_dtype),                 # (Rp, D)
        item2ent=build_item2ent_table(i_map, new_map, item_total, ent_total - 1),
    )


def jtransup_forward_rec(state, u_ids, i_ids, *, l1_flag, tile_b=1024):
    """is_rec=True branch of jTransUPModel.forward (use_st_gumbel=False)."""
    e_ids = state["item2ent"][i_ids]                    # device-side paddingItems
    u_e = state["user"][u_ids]                          # (B, D) f32 gathers
    ie_e = state["item"][i_ids] + state["ent"][e_ids]   # (B, D) f32
    # TODO(synk): gather u/item/ent rows inside the kernel (scalar-prefetched
    # ids + manual DMA from pl.ANY tables) to avoid this HBM round trip.
    return jtransup_score_pallas(u_e, ie_e, state["w_rT"], state["w_r"],
                                 state["w_n"], l1_flag=l1_flag, tile_b=tile_b)


# ---------------------------------------------------------------- reference --
def _reference_score(u_e, ie_e, w_r, w_n, l1_flag, mxu_dtype=jnp.bfloat16):
    """Pure-JAX mirror of the torch forward with the kernel's cast points
    (bf16 activations / MXU operands, f32 accumulation, unfused projections)."""
    f32 = jnp.float32
    u = u_e.astype(mxu_dtype).astype(f32)
    ie = ie_e.astype(mxu_dtype).astype(f32)
    wr = (0.5 * w_r).astype(mxu_dtype)
    wn = (0.5 * w_n).astype(mxu_dtype)
    pre = jnp.dot((u + ie).astype(mxu_dtype), wr.T, preferred_element_type=f32)
    p = pre.astype(mxu_dtype)
    r_e = jnp.dot(p, wr, preferred_element_type=f32)
    norm = jnp.dot(p, wn, preferred_element_type=f32)
    proj_u = u - jnp.sum(u * norm, -1, keepdims=True) * norm
    proj_i = ie - jnp.sum(ie * norm, -1, keepdims=True) * norm
    d = proj_u + r_e - proj_i
    return jnp.sum(jnp.abs(d), -1) if l1_flag else jnp.sum(d * d, -1)


# --------------------------------------------------------------------- main --
if __name__ == "__main__":
    # small shapes consistent with the module
    EMBED = 32
    USER_TOTAL = 16
    ITEM_TOTAL = 16
    ENTITY_TOTAL = 20          # ent_total = ENTITY_TOTAL + 1 (padding row)
    RELATION_TOTAL = 8
    BATCH = 8
    L1_FLAG = True

    ent_total = ENTITY_TOTAL + 1

    key = jax.random.PRNGKey(0)
    kp, ku, ki = jax.random.split(key, 3)
    params = init_jtransup_params(kp, USER_TOTAL, ITEM_TOTAL, ENTITY_TOTAL,
                                  RELATION_TOTAL, EMBED)

    # deterministic item->entity maps (some items map to padding via -1)
    i_map = {i: i for i in range(ITEM_TOTAL)}
    new_map = {i: (i if i < ENTITY_TOTAL and i % 5 != 4 else -1,)
               for i in range(ITEM_TOTAL)}

    state = prepare_jtransup(params, i_map, new_map, ITEM_TOTAL, ent_total,
                             mxu_dtype=jnp.bfloat16)

    u_ids = jax.random.randint(ku, (BATCH,), 0, USER_TOTAL, dtype=jnp.int32)
    i_ids = jax.random.randint(ki, (BATCH,), 0, ITEM_TOTAL, dtype=jnp.int32)

    fwd = jax.jit(functools.partial(jtransup_forward_rec, l1_flag=L1_FLAG))
    score = fwd(state, u_ids, i_ids)
    score = jax.block_until_ready(score)

    # cross-check against a pure-JAX reference using the same cast points
    e_ids = state["item2ent"][i_ids]
    u_e = params["user"][u_ids]
    ie_e = params["item"][i_ids] + params["ent"][e_ids]
    ref = _reference_score(u_e, ie_e, params["pref"] + params["rel"],
                           params["pref_norm"] + params["norm"], L1_FLAG,
                           mxu_dtype=jnp.bfloat16)

    assert score.shape == (BATCH,)
    assert bool(jnp.all(jnp.isfinite(score)))
    assert jnp.allclose(score, ref, atol=3e-3, rtol=3e-3), (score, ref)

    print("KERNEL_OK")
</pallas_src>

<mosaic_0001>
module attributes {stable_mosaic.version = 11 : i64} {
  func.func @_jtransup_score_kernel(%arg0: i32, %arg1: memref<128x32xbf16, #tpu.memory_space<vmem>>, %arg2: memref<128x32xbf16, #tpu.memory_space<vmem>>, %arg3: memref<32x128xbf16, #tpu.memory_space<vmem>>, %arg4: memref<128x32xbf16, #tpu.memory_space<vmem>>, %arg5: memref<128x32xbf16, #tpu.memory_space<vmem>>, %arg6: memref<1x1x128xf32, #tpu.memory_space<vmem>>) attributes {dimension_semantics = [#tpu.dimension_semantics<parallel>], iteration_bounds = array<i64: 1>, scalar_prefetch = 0 : i64, scratch_operands = 0 : i64, tpu.core_type = #tpu.core_type<tc>, window_params = [{transform_indices = @transform_0, window_bounds = array<i64: 128, 32>}, {transform_indices = @transform_1, window_bounds = array<i64: 128, 32>}, {pipeline_mode = #tpu.pipeline_mode<synchronous>, transform_indices = @transform_2, window_bounds = array<i64: 32, 128>}, {pipeline_mode = #tpu.pipeline_mode<synchronous>, transform_indices = @transform_3, window_bounds = array<i64: 128, 32>}, {pipeline_mode = #tpu.pipeline_mode<synchronous>, transform_indices = @transform_4, window_bounds = array<i64: 128, 32>}, {transform_indices = @transform_5, window_bounds = array<i64: 1, 1, 128>}]} {
    %c0 = arith.constant 0 : index
    %c0_0 = arith.constant 0 : index
    %0 = vector.load %arg1[%c0, %c0_0] : memref<128x32xbf16, #tpu.memory_space<vmem>>, vector<128x32xbf16>
    %1 = arith.extf %0 : vector<128x32xbf16> to vector<128x32xf32>
    %c0_1 = arith.constant 0 : index
    %c0_2 = arith.constant 0 : index
    %2 = vector.load %arg2[%c0_1, %c0_2] : memref<128x32xbf16, #tpu.memory_space<vmem>>, vector<128x32xbf16>
    %3 = arith.extf %2 : vector<128x32xbf16> to vector<128x32xf32>
    %4 = arith.addf %1, %3 : vector<128x32xf32>
    %5 = arith.truncf %4 : vector<128x32xf32> to vector<128x32xbf16>
    %c0_3 = arith.constant 0 : index
    %c0_4 = arith.constant 0 : index
    %6 = vector.load %arg3[%c0_3, %c0_4] : memref<32x128xbf16, #tpu.memory_space<vmem>>, vector<32x128xbf16>
    %cst = arith.constant dense<0.000000e+00> : vector<128x128xf32>
    %7 = tpu.matmul %5, %6, %cst {dimension_numbers = #tpu.dot_dimension_numbers<[1], [0], [0], [1], [0, 0, 1, 1], [], []>} : vector<128x32xbf16>, vector<32x128xbf16>, vector<128x128xf32> -> vector<128x128xf32>
    %8 = arith.truncf %7 : vector<128x128xf32> to vector<128x128xbf16>
    %c0_5 = arith.constant 0 : index
    %c0_6 = arith.constant 0 : index
    %9 = vector.load %arg4[%c0_5, %c0_6] : memref<128x32xbf16, #tpu.memory_space<vmem>>, vector<128x32xbf16>
    %cst_7 = arith.constant dense<0.000000e+00> : vector<128x32xf32>
    %10 = tpu.matmul %8, %9, %cst_7 {dimension_numbers = #tpu.dot_dimension_numbers<[1], [0], [0], [1], [0, 0, 1, 1], [], []>} : vector<128x128xbf16>, vector<128x32xbf16>, vector<128x32xf32> -> vector<128x32xf32>
    %c0_8 = arith.constant 0 : index
    %c0_9 = arith.constant 0 : index
    %11 = vector.load %arg5[%c0_8, %c0_9] : memref<128x32xbf16, #tpu.memory_space<vmem>>, vector<128x32xbf16>
    %cst_10 = arith.constant dense<0.000000e+00> : vector<128x32xf32>
    %12 = tpu.matmul %8, %11, %cst_10 {dimension_numbers = #tpu.dot_dimension_numbers<[1], [0], [0], [1], [0, 0, 1, 1], [], []>} : vector<128x128xbf16>, vector<128x32xbf16>, vector<128x32xf32> -> vector<128x32xf32>
    %13 = arith.subf %1, %3 : vector<128x32xf32>
    %14 = arith.mulf %13, %12 : vector<128x32xf32>
    %cst_11 = arith.constant dense<0.000000e+00> : vector<128xf32>
    %15 = vector.multi_reduction <add>, %14, %cst_11 [1] : vector<128x32xf32> to vector<128xf32>
    %16 = vector.shape_cast %15 : vector<128xf32> to vector<128x1xf32>
    %17 = vector.broadcast %16 : vector<128x1xf32> to vector<128x32xf32>
    %18 = arith.mulf %17, %12 : vector<128x32xf32>
    %19 = arith.subf %13, %18 : vector<128x32xf32>
    %20 = arith.addf %19, %10 : vector<128x32xf32>
    %21 = math.absf %20 : vector<128x32xf32>
    %cst_12 = arith.constant dense<0.000000e+00> : vector<128xf32>
    %22 = vector.multi_reduction <add>, %21, %cst_12 [1] : vector<128x32xf32> to vector<128xf32>
    %23 = vector.shape_cast %22 : vector<128xf32> to vector<1x1x128xf32>
    %c0_13 = arith.constant 0 : index
    %c0_14 = arith.constant 0 : index
    %c0_15 = arith.constant 0 : index
    %24 = vector.load %arg6[%c0_13, %c0_14, %c0_15] : memref<1x1x128xf32, #tpu.memory_space<vmem>>, vector<1x1x128xf32>
    tpu.vector_store %arg6[%c0_13, %c0_14, %c0_15], %23 {strides = array<i32>} : memref<1x1x128xf32, #tpu.memory_space<vmem>>, vector<1x1x128xf32>,
    return
  }
  func.func @transform_0(%arg0: i32) -> (i32, i32) {
    %c0_i32 = arith.constant 0 : i32
    %c0_i32_0 = arith.constant 0 : i32
    return %arg0, %c0_i32 : i32, i32
  }
  func.func @transform_1(%arg0: i32) -> (i32, i32) {
    %c0_i32 = arith.constant 0 : i32
    %c0_i32_0 = arith.constant 0 : i32
    return %arg0, %c0_i32 : i32, i32
  }
  func.func @transform_2(%arg0: i32) -> (i32, i32) {
    %c0_i32 = arith.constant 0 : i32
    %c0_i32_0 = arith.constant 0 : i32
    %c0_i32_1 = arith.constant 0 : i32
    return %c0_i32, %c0_i32_0 : i32, i32
  }
  func.func @transform_3(%arg0: i32) -> (i32, i32) {
    %c0_i32 = arith.constant 0 : i32
    %c0_i32_0 = arith.constant 0 : i32
    %c0_i32_1 = arith.constant 0 : i32
    return %c0_i32, %c0_i32_0 : i32, i32
  }
  func.func @transform_4(%arg0: i32) -> (i32, i32) {
    %c0_i32 = arith.constant 0 : i32
    %c0_i32_0 = arith.constant 0 : i32
    %c0_i32_1 = arith.constant 0 : i32
    return %c0_i32, %c0_i32_0 : i32, i32
  }
  func.func @transform_5(%arg0: i32) -> (i32, i32, i32) {
    %c0_i32 = arith.constant 0 : i32
    %c0_i32_0 = arith.constant 0 : i32
    %c0_i32_1 = arith.constant 0 : i32
    return %arg0, %c0_i32, %c0_i32_0 : i32, i32, i32
  }
}

</mosaic_0001>

<llo_original>
// kernel: jtransup_forward_rec.1
$region0: #{jtransup_forward_rec.1}
  #allocation0 [shape = 'u32[]', space=smem, size = 0x4, offset = 0x4, fixed_abs, tag = 'smem constant byte address 0x4 - core index']
  #allocation1 [shape = 'u32[72,128]{1,0:T(1,128)}', space=vmem, size = 0x9000, scoped, tag = 'internal scratch']
  %s0 = inlined_call_operand.vmem [shape: bf16[128,32], index: 0, kind: input, shape index: {}]
  %s1 = inlined_call_operand.vmem [shape: bf16[128,32], index: 1, kind: input, shape index: {}]
  %s2 = inlined_call_operand.vmem [shape: bf16[32,128], index: 2, kind: input, shape index: {}]
  %s3 = inlined_call_operand.vmem [shape: bf16[128,32], index: 3, kind: input, shape index: {}]
  %s4 = inlined_call_operand.vmem [shape: bf16[128,32], index: 4, kind: input, shape index: {}]
  %s5 = inlined_call_operand.vmem [shape: f32[1,1,128], index: 5, kind: output, shape index: {}]
  %s6 = sld [smem:[#allocation0]]
  $region30: #{jtransup_forward_rec.1} parent=0
    _
  %s8 = ssub.s32 1, %s6
  %s9 = scalar_select 0, %s8, %s6
  // Predicated region
  $region2: #{jtransup_forward_rec.1} parent=0 // pred_check
    _
  $region3: #{jtransup_forward_rec.1} parent=0 // pred_check_branch
    %11 = sbr.rel (0) target = $region5
  $region4: #{jtransup_forward_rec.1} parent=0 // pred_region
    _
  $region5: #{jtransup_forward_rec.1} parent=0 // pred_fallthru
    _
  // Predicated region
  $region6: #{jtransup_forward_rec.1} parent=0 // pred_check
    _
  $region7: #{jtransup_forward_rec.1} parent=0 // pred_check_branch
    %13 = sbr.rel (0) target = $region9
  $region8: #{jtransup_forward_rec.1} parent=0 // pred_region
    _
  $region9: #{jtransup_forward_rec.1} parent=0 // pred_fallthru
    _
  // Predicated region
  $region10: #{jtransup_forward_rec.1} parent=0 // pred_check
    _
  $region11: #{jtransup_forward_rec.1} parent=0 // pred_check_branch
    %15 = sbr.rel (0) target = $region13
  $region12: #{jtransup_forward_rec.1} parent=0 // pred_region
    _
  $region13: #{jtransup_forward_rec.1} parent=0 // pred_fallthru
    _
  // Predicated region
  $region14: #{jtransup_forward_rec.1} parent=0 // pred_check
    _
  $region15: #{jtransup_forward_rec.1} parent=0 // pred_check_branch
    %17 = sbr.rel (0) target = $region17
  $region16: #{jtransup_forward_rec.1} parent=0 // pred_region
    _
  $region17: #{jtransup_forward_rec.1} parent=0 // pred_fallthru
    _
  // Predicated region
  $region18: #{jtransup_forward_rec.1} parent=0 // pred_check
    _
  $region19: #{jtransup_forward_rec.1} parent=0 // pred_check_branch
    %19 = sbr.rel (0) target = $region21
  $region20: #{jtransup_forward_rec.1} parent=0 // pred_region
    _
  $region21: #{jtransup_forward_rec.1} parent=0 // pred_fallthru
    _
  %v21 = vld [vmem:[%s0] sm:$0xf]
  %v22 = vld [vmem:[%s0 + $0x4] sm:$0xf]
  %v23 = vld [vmem:[%s0 + $0x8] sm:$0xf]
  %v24 = vld [vmem:[%s0 + $0xc] sm:$0xf]
  %v25 = vld [vmem:[%s0 + $0x10] sm:$0xf]
  %v26 = vld [vmem:[%s0 + $0x14] sm:$0xf]
  %v27 = vld [vmem:[%s0 + $0x18] sm:$0xf]
  %v28 = vld [vmem:[%s0 + $0x1c] sm:$0xf]
  %v29 = vld [vmem:[%s0 + $0x20] sm:$0xf]
  %v30 = vld [vmem:[%s0 + $0x24] sm:$0xf]
  %v31 = vld [vmem:[%s0 + $0x28] sm:$0xf]
  %v32 = vld [vmem:[%s0 + $0x2c] sm:$0xf]
  %v33 = vld [vmem:[%s0 + $0x30] sm:$0xf]
  %v34 = vld [vmem:[%s0 + $0x34] sm:$0xf]
  %v35 = vld [vmem:[%s0 + $0x38] sm:$0xf]
  %v36 = vld [vmem:[%s0 + $0x3c] sm:$0xf]
  %v37 = vunpack.c.l.bf16 %v21
  %v38 = vunpack.c.l.bf16 %v22
  %v39 = vunpack.c.l.bf16 %v23
  %v40 = vunpack.c.l.bf16 %v24
  %v41 = vunpack.c.l.bf16 %v25
  %v42 = vunpack.c.l.bf16 %v26
  %v43 = vunpack.c.l.bf16 %v27
  %v44 = vunpack.c.l.bf16 %v28
  %v45 = vunpack.c.l.bf16 %v29
  %v46 = vunpack.c.l.bf16 %v30
  %v47 = vunpack.c.l.bf16 %v31
  %v48 = vunpack.c.l.bf16 %v32
  %v49 = vunpack.c.l.bf16 %v33
  %v50 = vunpack.c.l.bf16 %v34
  %v51 = vunpack.c.l.bf16 %v35
  %v52 = vunpack.c.l.bf16 %v36
  %v53 = vld [vmem:[%s1] sm:$0xf]
  %v54 = vld [vmem:[%s1 + $0x4] sm:$0xf]
  %v55 = vld [vmem:[%s1 + $0x8] sm:$0xf]
  %v56 = vld [vmem:[%s1 + $0xc] sm:$0xf]
  %v57 = vld [vmem:[%s1 + $0x10] sm:$0xf]
  %v58 = vld [vmem:[%s1 + $0x14] sm:$0xf]
  %v59 = vld [vmem:[%s1 + $0x18] sm:$0xf]
  %v60 = vld [vmem:[%s1 + $0x1c] sm:$0xf]
  %v61 = vld [vmem:[%s1 + $0x20] sm:$0xf]
  %v62 = vld [vmem:[%s1 + $0x24] sm:$0xf]
  %v63 = vld [vmem:[%s1 + $0x28] sm:$0xf]
  %v64 = vld [vmem:[%s1 + $0x2c] sm:$0xf]
  %v65 = vld [vmem:[%s1 + $0x30] sm:$0xf]
  %v66 = vld [vmem:[%s1 + $0x34] sm:$0xf]
  %v67 = vld [vmem:[%s1 + $0x38] sm:$0xf]
  %v68 = vld [vmem:[%s1 + $0x3c] sm:$0xf]
  %v69 = vunpack.c.l.bf16 %v53
  %v70 = vunpack.c.l.bf16 %v54
  %v71 = vunpack.c.l.bf16 %v55
  %v72 = vunpack.c.l.bf16 %v56
  %v73 = vunpack.c.l.bf16 %v57
  %v74 = vunpack.c.l.bf16 %v58
  %v75 = vunpack.c.l.bf16 %v59
  %v76 = vunpack.c.l.bf16 %v60
  %v77 = vunpack.c.l.bf16 %v61
  %v78 = vunpack.c.l.bf16 %v62
  %v79 = vunpack.c.l.bf16 %v63
  %v80 = vunpack.c.l.bf16 %v64
  %v81 = vunpack.c.l.bf16 %v65
  %v82 = vunpack.c.l.bf16 %v66
  %v83 = vunpack.c.l.bf16 %v67
  %v84 = vunpack.c.l.bf16 %v68
  %v85 = vadd.f32 %v37, %v69
  %v86 = vadd.f32 %v38, %v70
  %v87 = vadd.f32 %v39, %v71
  %v88 = vadd.f32 %v40, %v72
  %v89 = vadd.f32 %v41, %v73
  %v90 = vadd.f32 %v42, %v74
  %v91 = vadd.f32 %v43, %v75
  %v92 = vadd.f32 %v44, %v76
  %v93 = vadd.f32 %v45, %v77
  %v94 = vadd.f32 %v46, %v78
  %v95 = vadd.f32 %v47, %v79
  %v96 = vadd.f32 %v48, %v80
  %v97 = vadd.f32 %v49, %v81
  %v98 = vadd.f32 %v50, %v82
  %v99 = vadd.f32 %v51, %v83
  %v100 = vadd.f32 %v52, %v84
  %v101 = vpack.c.bf16 %v86, %v85
  %v102 = vpack.c.bf16 %v88, %v87
  %v103 = vpack.c.bf16 %v90, %v89
  %v104 = vpack.c.bf16 %v92, %v91
  %v105 = vpack.c.bf16 %v94, %v93
  %v106 = vpack.c.bf16 %v96, %v95
  %v107 = vpack.c.bf16 %v98, %v97
  %v108 = vpack.c.bf16 %v100, %v99
  %v109 = vld [vmem:[%s2] sm:$0xf]
  %v110 = vld [vmem:[%s2 + $0x4] sm:$0xf]
  %v111 = vld [vmem:[%s2 + $0x8] sm:$0xf]
  %v112 = vld [vmem:[%s2 + $0xc] sm:$0xf]
  %v117 = vunpack.c.l.b16 %v109
  %v118 = vunpack.c.l.b16 %v110
  %v119 = vunpack.c.l.b16 %v111
  %v120 = vunpack.c.l.b16 %v112
  %v121 = vpack.c.b16 %v118, %v117
  %v122 = vpack.c.b16 %v120, %v119
  %vm125 = vcmask 261120
  %v127 = vsel %vm125, %v101, 0
  %v130 = vsel %vm125, %v102, 0
  %v133 = vsel %vm125, %v103, 0
  %v136 = vsel %vm125, %v104, 0
  %v139 = vsel %vm125, %v105, 0
  %v142 = vsel %vm125, %v106, 0
  %v145 = vsel %vm125, %v107, 0
  %v148 = vsel %vm125, %v108, 0
  %150 = vmatpush.bf16.msra.mxu0 0
  %151 = vmatpush.bf16.msra.mxu0 0
  %152 = vmatpush.bf16.msra.mxu0 0
  %153 = vmatpush.bf16.msra.mxu0 0
  %154 = vmatpush.bf16.msra.mxu0 0
  %155 = vmatpush.bf16.msra.mxu0 0
  %156 = vmatpush.bf16.msra.mxu0 %v122
  %157 = vmatpush.bf16.msra.mxu0 %v121
  %158 = vmatmul.bf16.gmra.mxu0 %v127
  %v159 = vpop.f32.mrf.mxu0
  %v160 = vadd.f32 0.0, %v159
  %v161 = vpop.f32.mrf.mxu0
  %v162 = vadd.f32 0.0, %v161
  %163 = vmatmul.bf16.gmra.mxu0 %v130
  %v164 = vpop.f32.mrf.mxu0
  %v165 = vadd.f32 0.0, %v164
  %v166 = vpop.f32.mrf.mxu0
  %v167 = vadd.f32 0.0, %v166
  %168 = vmatmul.bf16.gmra.mxu0 %v133
  %v169 = vpop.f32.mrf.mxu0
  %v170 = vadd.f32 0.0, %v169
  %v171 = vpop.f32.mrf.mxu0
  %v172 = vadd.f32 0.0, %v171
  %173 = vmatmul.bf16.gmra.mxu0 %v136
  %v174 = vpop.f32.mrf.mxu0
  %v175 = vadd.f32 0.0, %v174
  %v176 = vpop.f32.mrf.mxu0
  %v177 = vadd.f32 0.0, %v176
  %178 = vmatmul.bf16.gmra.mxu0 %v139
  %v179 = vpop.f32.mrf.mxu0
  %v180 = vadd.f32 0.0, %v179
  %v181 = vpop.f32.mrf.mxu0
  %v182 = vadd.f32 0.0, %v181
  %183 = vmatmul.bf16.gmra.mxu0 %v142
  %v184 = vpop.f32.mrf.mxu0
  %v185 = vadd.f32 0.0, %v184
  %v186 = vpop.f32.mrf.mxu0
  %v187 = vadd.f32 0.0, %v186
  %188 = vmatmul.bf16.gmra.mxu0 %v145
  %v189 = vpop.f32.mrf.mxu0
  %v190 = vadd.f32 0.0, %v189
  %v191 = vpop.f32.mrf.mxu0
  %v192 = vadd.f32 0.0, %v191
  %193 = vmatmul.bf16.gmra.mxu0 %v148
  %v194 = vpop.f32.mrf.mxu0
  %v195 = vadd.f32 0.0, %v194
  %v196 = vpop.f32.mrf.mxu0
  %v197 = vadd.f32 0.0, %v196
  %198 = vdwg.mxu0
  %v199 = vpack.c.bf16 %v162, %v160
  %v200 = vpack.c.bf16 %v167, %v165
  %v201 = vpack.c.bf16 %v172, %v170
  %v202 = vpack.c.bf16 %v177, %v175
  %v203 = vpack.c.bf16 %v182, %v180
  %v204 = vpack.c.bf16 %v187, %v185
  %v205 = vpack.c.bf16 %v192, %v190
  %v206 = vpack.c.bf16 %v197, %v195
  %v207 = vld [vmem:[%s3] sm:$0xf]
  %v208 = vld [vmem:[%s3 + $0x4] sm:$0xf]
  %v209 = vld [vmem:[%s3 + $0x8] sm:$0xf]
  %v210 = vld [vmem:[%s3 + $0xc] sm:$0xf]
  %v211 = vld [vmem:[%s3 + $0x10] sm:$0xf]
  %v212 = vld [vmem:[%s3 + $0x14] sm:$0xf]
  %v213 = vld [vmem:[%s3 + $0x18] sm:$0xf]
  %v214 = vld [vmem:[%s3 + $0x1c] sm:$0xf]
  %v215 = vld [vmem:[%s3 + $0x20] sm:$0xf]
  %v216 = vld [vmem:[%s3 + $0x24] sm:$0xf]
  %v217 = vld [vmem:[%s3 + $0x28] sm:$0xf]
  %v218 = vld [vmem:[%s3 + $0x2c] sm:$0xf]
  %v219 = vld [vmem:[%s3 + $0x30] sm:$0xf]
  %v220 = vld [vmem:[%s3 + $0x34] sm:$0xf]
  %v221 = vld [vmem:[%s3 + $0x38] sm:$0xf]
  %v222 = vld [vmem:[%s3 + $0x3c] sm:$0xf]
  %v239 = vunpack.c.l.b16 %v207
  %v240 = vunpack.c.l.b16 %v208
  %v241 = vunpack.c.l.b16 %v209
  %v242 = vunpack.c.l.b16 %v210
  %v243 = vunpack.c.l.b16 %v211
  %v244 = vunpack.c.l.b16 %v212
  %v245 = vunpack.c.l.b16 %v213
  %v246 = vunpack.c.l.b16 %v214
  %v247 = vunpack.c.l.b16 %v215
  %v248 = vunpack.c.l.b16 %v216
  %v249 = vunpack.c.l.b16 %v217
  %v250 = vunpack.c.l.b16 %v218
  %v251 = vunpack.c.l.b16 %v219
  %v252 = vunpack.c.l.b16 %v220
  %v253 = vunpack.c.l.b16 %v221
  %v254 = vunpack.c.l.b16 %v222
  %v255 = vpack.c.b16 %v240, %v239
  %v256 = vpack.c.b16 %v242, %v241
  %v257 = vpack.c.b16 %v244, %v243
  %v258 = vpack.c.b16 %v246, %v245
  %v259 = vpack.c.b16 %v248, %v247
  %v260 = vpack.c.b16 %v250, %v249
  %v261 = vpack.c.b16 %v252, %v251
  %v262 = vpack.c.b16 %v254, %v253
  %271 = vmatpush.bf16.msra.mxu0 %v262
  %272 = vmatpush.bf16.msra.mxu0 %v261
  %273 = vmatpush.bf16.msra.mxu0 %v260
  %274 = vmatpush.bf16.msra.mxu0 %v259
  %275 = vmatpush.bf16.msra.mxu0 %v258
  %276 = vmatpush.bf16.msra.mxu0 %v257
  %277 = vmatpush.bf16.msra.mxu0 %v256
  %278 = vmatpush.bf16.msra.mxu0 %v255
  %279 = vmatmul.bf16.gmra.mxu0 %v199
  %v280 = vpop.f32.mrf.mxu0
  %v281 = vadd.f32 0.0, %v280
  %v282 = vpop.f32.mrf.mxu0
  %v283 = vadd.f32 0.0, %v282
  %284 = vmatmul.bf16.gmra.mxu0 %v200
  %v285 = vpop.f32.mrf.mxu0
  %v286 = vadd.f32 0.0, %v285
  %v287 = vpop.f32.mrf.mxu0
  %v288 = vadd.f32 0.0, %v287
  %289 = vmatmul.bf16.gmra.mxu0 %v201
  %v290 = vpop.f32.mrf.mxu0
  %v291 = vadd.f32 0.0, %v290
  %v292 = vpop.f32.mrf.mxu0
  %v293 = vadd.f32 0.0, %v292
  %294 = vmatmul.bf16.gmra.mxu0 %v202
  %v295 = vpop.f32.mrf.mxu0
  %v296 = vadd.f32 0.0, %v295
  %v297 = vpop.f32.mrf.mxu0
  %v298 = vadd.f32 0.0, %v297
  %299 = vmatmul.bf16.gmra.mxu0 %v203
  %v300 = vpop.f32.mrf.mxu0
  %v301 = vadd.f32 0.0, %v300
  %v302 = vpop.f32.mrf.mxu0
  %v303 = vadd.f32 0.0, %v302
  %304 = vmatmul.bf16.gmra.mxu0 %v204
  %v305 = vpop.f32.mrf.mxu0
  %v306 = vadd.f32 0.0, %v305
  %v307 = vpop.f32.mrf.mxu0
  %v308 = vadd.f32 0.0, %v307
  %309 = vmatmul.bf16.gmra.mxu0 %v205
  %v310 = vpop.f32.mrf.mxu0
  %v311 = vadd.f32 0.0, %v310
  %v312 = vpop.f32.mrf.mxu0
  %v313 = vadd.f32 0.0, %v312
  %314 = vmatmul.bf16.gmra.mxu0 %v206
  %v315 = vpop.f32.mrf.mxu0
  %v316 = vadd.f32 0.0, %v315
  %v317 = vpop.f32.mrf.mxu0
  %v318 = vadd.f32 0.0, %v317
  %319 = vdwg.mxu0
  %v320 = vld [vmem:[%s4] sm:$0xf]
  %v321 = vld [vmem:[%s4 + $0x4] sm:$0xf]
  %v322 = vld [vmem:[%s4 + $0x8] sm:$0xf]
  %v323 = vld [vmem:[%s4 + $0xc] sm:$0xf]
  %v324 = vld [vmem:[%s4 + $0x10] sm:$0xf]
  %v325 = vld [vmem:[%s4 + $0x14] sm:$0xf]
  %v326 = vld [vmem:[%s4 + $0x18] sm:$0xf]
  %v327 = vld [vmem:[%s4 + $0x1c] sm:$0xf]
  %v328 = vld [vmem:[%s4 + $0x20] sm:$0xf]
  %v329 = vld [vmem:[%s4 + $0x24] sm:$0xf]
  %v330 = vld [vmem:[%s4 + $0x28] sm:$0xf]
  %v331 = vld [vmem:[%s4 + $0x2c] sm:$0xf]
  %v332 = vld [vmem:[%s4 + $0x30] sm:$0xf]
  %v333 = vld [vmem:[%s4 + $0x34] sm:$0xf]
  %v334 = vld [vmem:[%s4 + $0x38] sm:$0xf]
  %v335 = vld [vmem:[%s4 + $0x3c] sm:$0xf]
  %v352 = vunpack.c.l.b16 %v320
  %v353 = vunpack.c.l.b16 %v321
  %v354 = vunpack.c.l.b16 %v322
  %v355 = vunpack.c.l.b16 %v323
  %v356 = vunpack.c.l.b16 %v324
  %v357 = vunpack.c.l.b16 %v325
  %v358 = vunpack.c.l.b16 %v326
  %v359 = vunpack.c.l.b16 %v327
  %v360 = vunpack.c.l.b16 %v328
  %v361 = vunpack.c.l.b16 %v329
  %v362 = vunpack.c.l.b16 %v330
  %v363 = vunpack.c.l.b16 %v331
  %v364 = vunpack.c.l.b16 %v332
  %v365 = vunpack.c.l.b16 %v333
  %v366 = vunpack.c.l.b16 %v334
  %v367 = vunpack.c.l.b16 %v335
  %v368 = vpack.c.b16 %v353, %v352
  %v369 = vpack.c.b16 %v355, %v354
  %v370 = vpack.c.b16 %v357, %v356
  %v371 = vpack.c.b16 %v359, %v358
  %v372 = vpack.c.b16 %v361, %v360
  %v373 = vpack.c.b16 %v363, %v362
  %v374 = vpack.c.b16 %v365, %v364
  %v375 = vpack.c.b16 %v367, %v366
  %384 = vmatpush.bf16.msra.mxu0 %v375
  %385 = vmatpush.bf16.msra.mxu0 %v374
  %386 = vmatpush.bf16.msra.mxu0 %v373
  %387 = vmatpush.bf16.msra.mxu0 %v372
  %388 = vmatpush.bf16.msra.mxu0 %v371
  %389 = vmatpush.bf16.msra.mxu0 %v370
  %390 = vmatpush.bf16.msra.mxu0 %v369
  %391 = vmatpush.bf16.msra.mxu0 %v368
  %392 = vmatmul.bf16.gmra.mxu0 %v199
  %v393 = vpop.f32.mrf.mxu0
  %v394 = vadd.f32 0.0, %v393
  %v395 = vpop.f32.mrf.mxu0
  %v396 = vadd.f32 0.0, %v395
  %397 = vmatmul.bf16.gmra.mxu0 %v200
  %v398 = vpop.f32.mrf.mxu0
  %v399 = vadd.f32 0.0, %v398
  %v400 = vpop.f32.mrf.mxu0
  %v401 = vadd.f32 0.0, %v400
  %402 = vmatmul.bf16.gmra.mxu0 %v201
  %v403 = vpop.f32.mrf.mxu0
  %v404 = vadd.f32 0.0, %v403
  %v405 = vpop.f32.mrf.mxu0
  %v406 = vadd.f32 0.0, %v405
  %407 = vmatmul.bf16.gmra.mxu0 %v202
  %v408 = vpop.f32.mrf.mxu0
  %v409 = vadd.f32 0.0, %v408
  %v410 = vpop.f32.mrf.mxu0
  %v411 = vadd.f32 0.0, %v410
  %412 = vmatmul.bf16.gmra.mxu0 %v203
  %v413 = vpop.f32.mrf.mxu0
  %v414 = vadd.f32 0.0, %v413
  %v415 = vpop.f32.mrf.mxu0
  %v416 = vadd.f32 0.0, %v415
  %417 = vmatmul.bf16.gmra.mxu0 %v204
  %v418 = vpop.f32.mrf.mxu0
  %v419 = vadd.f32 0.0, %v418
  %v420 = vpop.f32.mrf.mxu0
  %v421 = vadd.f32 0.0, %v420
  %422 = vmatmul.bf16.gmra.mxu0 %v205
  %v423 = vpop.f32.mrf.mxu0
  %v424 = vadd.f32 0.0, %v423
  %v425 = vpop.f32.mrf.mxu0
  %v426 = vadd.f32 0.0, %v425
  %427 = vmatmul.bf16.gmra.mxu0 %v206
  %v428 = vpop.f32.mrf.mxu0
  %v429 = vadd.f32 0.0, %v428
  %v430 = vpop.f32.mrf.mxu0
  %v431 = vadd.f32 0.0, %v430
  %432 = vdwg.mxu0
  %v433 = vsub.f32 %v37, %v69
  %v434 = vsub.f32 %v38, %v70
  %v435 = vsub.f32 %v39, %v71
  %v436 = vsub.f32 %v40, %v72
  %v437 = vsub.f32 %v41, %v73
  %v438 = vsub.f32 %v42, %v74
  %v439 = vsub.f32 %v43, %v75
  %v440 = vsub.f32 %v44, %v76
  %v441 = vsub.f32 %v45, %v77
  %v442 = vsub.f32 %v46, %v78
  %v443 = vsub.f32 %v47, %v79
  %v444 = vsub.f32 %v48, %v80
  %v445 = vsub.f32 %v49, %v81
  %v446 = vsub.f32 %v50, %v82
  %v447 = vsub.f32 %v51, %v83
  %v448 = vsub.f32 %v52, %v84
  %v449 = vmul.f32 %v433, %v394
  %v450 = vmul.f32 %v434, %v396
  %v451 = vmul.f32 %v435, %v399
  %v452 = vmul.f32 %v436, %v401
  %v453 = vmul.f32 %v437, %v404
  %v454 = vmul.f32 %v438, %v406
  %v455 = vmul.f32 %v439, %v409
  %v456 = vmul.f32 %v440, %v411
  %v457 = vmul.f32 %v441, %v414
  %v458 = vmul.f32 %v442, %v416
  %v459 = vmul.f32 %v443, %v419
  %v460 = vmul.f32 %v444, %v421
  %v461 = vmul.f32 %v445, %v424
  %v462 = vmul.f32 %v446, %v426
  %v463 = vmul.f32 %v447, %v429
  %v464 = vmul.f32 %v448, %v431
  %v465 = vsel %vm125, %v449, 0.0
  %466 = vadd.xlane.f32.xlu0 %v465
  %v467 = vpop.xlane.xlu0 %466
  %v468 = vsel %vm125, %v450, 0.0
  %469 = vadd.xlane.f32.xlu0 %v468
  %v470 = vpop.xlane.xlu0 %469
  %v471 = vsel %vm125, %v451, 0.0
  %472 = vadd.xlane.f32.xlu0 %v471
  %v473 = vpop.xlane.xlu0 %472
  %v474 = vsel %vm125, %v452, 0.0
  %475 = vadd.xlane.f32.xlu0 %v474
  %v476 = vpop.xlane.xlu0 %475
  %v477 = vsel %vm125, %v453, 0.0
  %478 = vadd.xlane.f32.xlu0 %v477
  %v479 = vpop.xlane.xlu0 %478
  %v480 = vsel %vm125, %v454, 0.0
  %481 = vadd.xlane.f32.xlu0 %v480
  %v482 = vpop.xlane.xlu0 %481
  %v483 = vsel %vm125, %v455, 0.0
  %484 = vadd.xlane.f32.xlu0 %v483
  %v485 = vpop.xlane.xlu0 %484
  %v486 = vsel %vm125, %v456, 0.0
  %487 = vadd.xlane.f32.xlu0 %v486
  %v488 = vpop.xlane.xlu0 %487
  %v489 = vsel %vm125, %v457, 0.0
  %490 = vadd.xlane.f32.xlu0 %v489
  %v491 = vpop.xlane.xlu0 %490
  %v492 = vsel %vm125, %v458, 0.0
  %493 = vadd.xlane.f32.xlu0 %v492
  %v494 = vpop.xlane.xlu0 %493
  %v495 = vsel %vm125, %v459, 0.0
  %496 = vadd.xlane.f32.xlu0 %v495
  %v497 = vpop.xlane.xlu0 %496
  %v498 = vsel %vm125, %v460, 0.0
  %499 = vadd.xlane.f32.xlu0 %v498
  %v500 = vpop.xlane.xlu0 %499
  %v501 = vsel %vm125, %v461, 0.0
  %502 = vadd.xlane.f32.xlu0 %v501
  %v503 = vpop.xlane.xlu0 %502
  %v504 = vsel %vm125, %v462, 0.0
  %505 = vadd.xlane.f32.xlu0 %v504
  %v506 = vpop.xlane.xlu0 %505
  %v507 = vsel %vm125, %v463, 0.0
  %508 = vadd.xlane.f32.xlu0 %v507
  %v509 = vpop.xlane.xlu0 %508
  %v510 = vsel %vm125, %v464, 0.0
  %511 = vadd.xlane.f32.xlu0 %v510
  %v512 = vpop.xlane.xlu0 %511
  %v513 = vmul.f32 %v467, %v394
  %v514 = vmul.f32 %v470, %v396
  %v515 = vmul.f32 %v473, %v399
  %v516 = vmul.f32 %v476, %v401
  %v517 = vmul.f32 %v479, %v404
  %v518 = vmul.f32 %v482, %v406
  %v519 = vmul.f32 %v485, %v409
  %v520 = vmul.f32 %v488, %v411
  %v521 = vmul.f32 %v491, %v414
  %v522 = vmul.f32 %v494, %v416
  %v523 = vmul.f32 %v497, %v419
  %v524 = vmul.f32 %v500, %v421
  %v525 = vmul.f32 %v503, %v424
  %v526 = vmul.f32 %v506, %v426
  %v527 = vmul.f32 %v509, %v429
  %v528 = vmul.f32 %v512, %v431
  %v529 = vsub.f32 %v433, %v513
  %v530 = vsub.f32 %v434, %v514
  %v531 = vsub.f32 %v435, %v515
  %v532 = vsub.f32 %v436, %v516
  %v533 = vsub.f32 %v437, %v517
  %v534 = vsub.f32 %v438, %v518
  %v535 = vsub.f32 %v439, %v519
  %v536 = vsub.f32 %v440, %v520
  %v537 = vsub.f32 %v441, %v521
  %v538 = vsub.f32 %v442, %v522
  %v539 = vsub.f32 %v443, %v523
  %v540 = vsub.f32 %v444, %v524
  %v541 = vsub.f32 %v445, %v525
  %v542 = vsub.f32 %v446, %v526
  %v543 = vsub.f32 %v447, %v527
  %v544 = vsub.f32 %v448, %v528
  %v545 = vadd.f32 %v529, %v281
  %v546 = vadd.f32 %v530, %v283
  %v547 = vadd.f32 %v531, %v286
  %v548 = vadd.f32 %v532, %v288
  %v549 = vadd.f32 %v533, %v291
  %v550 = vadd.f32 %v534, %v293
  %v551 = vadd.f32 %v535, %v296
  %v552 = vadd.f32 %v536, %v298
  %v553 = vadd.f32 %v537, %v301
  %v554 = vadd.f32 %v538, %v303
  %v555 = vadd.f32 %v539, %v306
  %v556 = vadd.f32 %v540, %v308
  %v557 = vadd.f32 %v541, %v311
  %v558 = vadd.f32 %v542, %v313
  %v559 = vadd.f32 %v543, %v316
  %v560 = vadd.f32 %v544, %v318
  %v561 = vand.u32 2147483647, %v545
  %v562 = vand.u32 2147483647, %v546
  %v563 = vand.u32 2147483647, %v547
  %v564 = vand.u32 2147483647, %v548
  %v565 = vand.u32 2147483647, %v549
  %v566 = vand.u32 2147483647, %v550
  %v567 = vand.u32 2147483647, %v551
  %v568 = vand.u32 2147483647, %v552
  %v569 = vand.u32 2147483647, %v553
  %v570 = vand.u32 2147483647, %v554
  %v571 = vand.u32 2147483647, %v555
  %v572 = vand.u32 2147483647, %v556
  %v573 = vand.u32 2147483647, %v557
  %v574 = vand.u32 2147483647, %v558
  %v575 = vand.u32 2147483647, %v559
  %v576 = vand.u32 2147483647, %v560
  %v577 = vsel %vm125, %v561, 0.0
  %578 = vadd.xlane.f32.xlu0 %v577
  %v579 = vpop.xlane.xlu0 %578
  %v580 = vsel %vm125, %v562, 0.0
  %581 = vadd.xlane.f32.xlu0 %v580
  %v582 = vpop.xlane.xlu0 %581
  %v583 = vsel %vm125, %v563, 0.0
  %584 = vadd.xlane.f32.xlu0 %v583
  %v585 = vpop.xlane.xlu0 %584
  %v586 = vsel %vm125, %v564, 0.0
  %587 = vadd.xlane.f32.xlu0 %v586
  %v588 = vpop.xlane.xlu0 %587
  %v589 = vsel %vm125, %v565, 0.0
  %590 = vadd.xlane.f32.xlu0 %v589
  %v591 = vpop.xlane.xlu0 %590
  %v592 = vsel %vm125, %v566, 0.0
  %593 = vadd.xlane.f32.xlu0 %v592
  %v594 = vpop.xlane.xlu0 %593
  %v595 = vsel %vm125, %v567, 0.0
  %596 = vadd.xlane.f32.xlu0 %v595
  %v597 = vpop.xlane.xlu0 %596
  %v598 = vsel %vm125, %v568, 0.0
  %599 = vadd.xlane.f32.xlu0 %v598
  %v600 = vpop.xlane.xlu0 %599
  %v601 = vsel %vm125, %v569, 0.0
  %602 = vadd.xlane.f32.xlu0 %v601
  %v603 = vpop.xlane.xlu0 %602
  %v604 = vsel %vm125, %v570, 0.0
  %605 = vadd.xlane.f32.xlu0 %v604
  %v606 = vpop.xlane.xlu0 %605
  %v607 = vsel %vm125, %v571, 0.0
  %608 = vadd.xlane.f32.xlu0 %v607
  %v609 = vpop.xlane.xlu0 %608
  %v610 = vsel %vm125, %v572, 0.0
  %611 = vadd.xlane.f32.xlu0 %v610
  %v612 = vpop.xlane.xlu0 %611
  %v613 = vsel %vm125, %v573, 0.0
  %614 = vadd.xlane.f32.xlu0 %v613
  %v615 = vpop.xlane.xlu0 %614
  %v616 = vsel %vm125, %v574, 0.0
  %617 = vadd.xlane.f32.xlu0 %v616
  %v618 = vpop.xlane.xlu0 %617
  %v619 = vsel %vm125, %v575, 0.0
  %620 = vadd.xlane.f32.xlu0 %v619
  %v621 = vpop.xlane.xlu0 %620
  %v622 = vsel %vm125, %v576, 0.0
  %623 = vadd.xlane.f32.xlu0 %v622
  %v624 = vpop.xlane.xlu0 %623
  %v641 = vlaneseq
  %v642 = vand.u32 %v641, 127
  %v643 = vperm.slane %v579, %v642
  %v644 = vadd.s32 %v642, 4294967288
  %v645 = vperm.slane %v582, %v644
  %vm646 = vcmask 130112
  %v647 = vsel %vm646, %v645, %v643
  %v648 = vadd.s32 %v642, 4294967280
  %v649 = vperm.slane %v585, %v648
  %vm650 = vcmask 195712
  %v651 = vsel %vm650, %v649, %v647
  %v652 = vadd.s32 %v642, 4294967272
  %v653 = vperm.slane %v588, %v652
  %vm654 = vcmask 261312
  %v655 = vsel %vm654, %v653, %v651
  %v656 = vadd.s32 %v642, 4294967264
  %v657 = vperm.slane %v591, %v656
  %vm658 = vcmask 326912
  %v659 = vsel %vm658, %v657, %v655
  %v660 = vadd.s32 %v642, 4294967256
  %v661 = vperm.slane %v594, %v660
  %vm662 = vcmask 392512
  %v663 = vsel %vm662, %v661, %v659
  %v664 = vadd.s32 %v642, 4294967248
  %v665 = vperm.slane %v597, %v664
  %vm666 = vcmask 458112
  %v667 = vsel %vm666, %v665, %v663
  %v668 = vadd.s32 %v642, 4294967240
  %v669 = vperm.slane %v600, %v668
  %vm670 = vcmask 523712
  %v671 = vsel %vm670, %v669, %v667
  %v672 = vadd.s32 %v642, 4294967232
  %v673 = vperm.slane %v603, %v672
  %vm674 = vcmask 589312
  %v675 = vsel %vm674, %v673, %v671
  %v676 = vadd.s32 %v642, 4294967224
  %v677 = vperm.slane %v606, %v676
  %vm678 = vcmask 654912
  %v679 = vsel %vm678, %v677, %v675
  %v680 = vadd.s32 %v642, 4294967216
  %v681 = vperm.slane %v609, %v680
  %vm682 = vcmask 720512
  %v683 = vsel %vm682, %v681, %v679
  %v684 = vadd.s32 %v642, 4294967208
  %v685 = vperm.slane %v612, %v684
  %vm686 = vcmask 786112
  %v687 = vsel %vm686, %v685, %v683
  %v688 = vadd.s32 %v642, 4294967200
  %v689 = vperm.slane %v615, %v688
  %vm690 = vcmask 851712
  %v691 = vsel %vm690, %v689, %v687
  %v692 = vadd.s32 %v642, 4294967192
  %v693 = vperm.slane %v618, %v692
  %vm694 = vcmask 917312
  %v695 = vsel %vm694, %v693, %v691
  %v696 = vadd.s32 %v642, 4294967184
  %v697 = vperm.slane %v621, %v696
  %vm698 = vcmask 982912
  %v699 = vsel %vm698, %v697, %v695
  %v700 = vadd.s32 %v642, 4294967176
  %v701 = vperm.slane %v624, %v700
  %vm702 = vcmask 1048512
  %v703 = vsel %vm702, %v701, %v699
  %705 = vst [vmem:[%s5] sm:$0x1] %v703
  // Predicated region
  $region22: #{jtransup_forward_rec.1} parent=0 // pred_check
    _
  $region23: #{jtransup_forward_rec.1} parent=0 // pred_check_branch
    %707 = sbr.rel (0) target = $region25
  $region24: #{jtransup_forward_rec.1} parent=0 // pred_region
    _
  $region25: #{jtransup_forward_rec.1} parent=0 // pred_fallthru
    _
  // Predicated region
  $region26: #{jtransup_forward_rec.1} parent=0 // pred_check
    _
  $region27: #{jtransup_forward_rec.1} parent=0 // pred_check_branch
    %709 = sbr.rel (0) target = $region29
  $region28: #{jtransup_forward_rec.1} parent=0 // pred_region
    _
  $region29: #{jtransup_forward_rec.1} parent=0 // pred_fallthru
    _

</llo_original>
